<compile_context>
chip_gen: v6e
topology: v6e:2x2x1
jax: 0.10.0
libtpu: 0.0.40
codegen_flags: <defaults>
</compile_context>

<pallas_src>
import jax
import jax.numpy as jnp
from jax.experimental import pallas as pl
from jax.experimental.pallas import tpu as pltpu

_LANE = 128


def _relu_kernel(x_ref, o_ref):
    o_ref[...] = jnp.maximum(x_ref[...], 0)


def _ceil_to(v: int, m: int) -> int:
    return -(-v // m) * m


def _row_granularity(dtype) -> int:
    # Sub-32-bit dtypes pack multiple rows per (8,128) vreg tile; keep tile
    # row counts aligned so stores stay unmasked (8 f32, 16 bf16, 32 int8).
    itemsize = jnp.dtype(dtype).itemsize
    return max(8, 32 // max(itemsize, 1))


def _device_kind() -> str:
    try:
        return jax.devices()[0].device_kind.lower()
    except Exception:  # pragma: no cover - defensive, e.g. no backend yet
        return ""


# Static, trace-time constants derived from the local device generation.
_KIND = _device_kind()
_IS_V5 = "v5" in _KIND                       # v5e/v5p: 16 MiB scoped-VMEM default
_IS_V7 = ("v7" in _KIND) or ("7x" in _KIND)  # 2 TensorCores per chip
_BLOCK_BYTES = (2 << 20) if _IS_V5 else (4 << 20)
# in+out, double-buffered = 4x block; keep explicit headroom, well under
# every generation's physical VMEM (64-128 MiB).
_VMEM_LIMIT = max(16 << 20, 5 * _BLOCK_BYTES)


def _relu_2d(x2d: jax.Array, tile_rows: int) -> jax.Array:
    rows, lane = x2d.shape
    grid = (pl.cdiv(rows, tile_rows),)
    return pl.pallas_call(
        _relu_kernel,
        out_shape=jax.ShapeDtypeStruct((rows, lane), x2d.dtype),
        grid_spec=pl.GridSpec(
            grid=grid,
            in_specs=[pl.BlockSpec((tile_rows, lane), lambda i: (i, 0))],
            out_specs=pl.BlockSpec((tile_rows, lane), lambda i: (i, 0)),
        ),
        compiler_params=pltpu.CompilerParams(
            dimension_semantics=("parallel",),
            vmem_limit_bytes=_VMEM_LIMIT,
        ),
    )(x2d)


@jax.jit
def relu_pallas(x: jax.Array) -> jax.Array:
    """Elementwise ReLU via a Pallas TPU kernel. Accepts any shape/dtype."""
    orig_shape = x.shape
    dtype = x.dtype
    n = x.size
    if n == 0:  # trace-time guard
        return x

    itemsize = jnp.dtype(dtype).itemsize
    gran = _row_granularity(dtype)

    xf = jnp.reshape(x, (n,))
    n_aligned = (n // _LANE) * _LANE

    if n_aligned == 0:
        # Fewer than 128 elements: per-step overhead dwarfs a kernel launch.
        return jnp.reshape(jnp.maximum(xf, 0), orig_shape)

    rows = n_aligned // _LANE
    if n_aligned == n:
        head = jnp.reshape(xf, (rows, _LANE))
    else:
        head = jnp.reshape(xf[:n_aligned], (rows, _LANE))

    # Tile selection: big streaming blocks; cdiv grid masks the partial last
    # block so no row padding is ever needed.
    max_rows = _ceil_to(max(gran, _BLOCK_BYTES // (_LANE * itemsize)), gran)
    if rows > max_rows:
        tile_rows = max_rows
    else:
        tile_rows = _ceil_to(rows, gran)  # single block (single grid step)
        # v7x megacore: split into 2 grid steps only when each per-TC block
        # is big enough (>= ~256 KiB) to amortize the per-step overhead.
        half_bytes = (rows * _LANE * itemsize) // 2
        if _IS_V7 and rows >= 2 * gran and half_bytes >= (256 << 10):
            tile_rows = _ceil_to(-(-rows // 2), gran)

    head_out = jnp.reshape(_relu_2d(head, tile_rows), (n_aligned,))

    if n_aligned == n:
        return jnp.reshape(head_out, orig_shape)

    # Ragged tail (< 128 elements): plain jnp, fused by XLA.
    tail_out = jnp.maximum(xf[n_aligned:], 0)
    return jnp.reshape(jnp.concatenate([head_out, tail_out]), orig_shape)


if __name__ == "__main__":
    key = jax.random.PRNGKey(0)
    # Shape matching the module's forward input: [1, 384, 12, 12], NCHW.
    x = jax.random.normal(key, (1, 384, 12, 12), dtype=jnp.float32)

    y = jax.block_until_ready(relu_pallas(x))

    # Correctness check against pure-JAX reference.
    ref = jnp.maximum(x, 0.0)
    assert y.shape == x.shape and y.dtype == x.dtype
    assert jnp.allclose(y, ref), "mismatch vs reference relu"

    print("KERNEL_OK")
</pallas_src>

<mosaic_0001>
module attributes {stable_mosaic.version = 11 : i64} {
  func.func @_relu_kernel(%arg0: i32, %arg1: memref<432x128xf32, #tpu.memory_space<vmem>>, %arg2: memref<432x128xf32, #tpu.memory_space<vmem>>) attributes {dimension_semantics = [#tpu.dimension_semantics<parallel>], iteration_bounds = array<i64: 1>, scalar_prefetch = 0 : i64, scratch_operands = 0 : i64, tpu.core_type = #tpu.core_type<tc>, window_params = [{transform_indices = @transform_0, window_bounds = array<i64: 432, 128>}, {transform_indices = @transform_1, window_bounds = array<i64: 432, 128>}]} {
    %c0 = arith.constant 0 : index
    %c0_0 = arith.constant 0 : index
    %0 = vector.load %arg1[%c0, %c0_0] : memref<432x128xf32, #tpu.memory_space<vmem>>, vector<432x128xf32>
    %cst = arith.constant 0.000000e+00 : f32
    %1 = vector.broadcast %cst : f32 to vector<432x128xf32>
    %2 = arith.maximumf %0, %1 : vector<432x128xf32>
    %c0_1 = arith.constant 0 : index
    %c0_2 = arith.constant 0 : index
    %3 = vector.load %arg2[%c0_1, %c0_2] : memref<432x128xf32, #tpu.memory_space<vmem>>, vector<432x128xf32>
    tpu.vector_store %arg2[%c0_1, %c0_2], %2 {strides = array<i32>} : memref<432x128xf32, #tpu.memory_space<vmem>>, vector<432x128xf32>,
    return
  }
  func.func @transform_0(%arg0: i32) -> (i32, i32) {
    %c0_i32 = arith.constant 0 : i32
    %c0_i32_0 = arith.constant 0 : i32
    return %arg0, %c0_i32 : i32, i32
  }
  func.func @transform_1(%arg0: i32) -> (i32, i32) {
    %c0_i32 = arith.constant 0 : i32
    %c0_i32_0 = arith.constant 0 : i32
    return %arg0, %c0_i32 : i32, i32
  }
}

</mosaic_0001>

<llo_original>
// kernel: relu_pallas.1
$region0: #{relu_pallas.1}
  #allocation0 [shape = 'u32[]', space=smem, size = 0x4, offset = 0x4, fixed_abs, tag = 'smem constant byte address 0x4 - core index']
  #allocation1 [shape = 'u32[144,128]{1,0:T(1,128)}', space=vmem, size = 0x12000, scoped, tag = 'internal scratch']
  %s0 = inlined_call_operand.vmem [shape: f32[432,128], index: 0, kind: input, shape index: {}]
  %s1 = inlined_call_operand.vmem [shape: f32[432,128], index: 1, kind: output, shape index: {}]
  %s2 = sld [smem:[#allocation0]]
  $region14: #{relu_pallas.1} parent=0
    _
  %s4 = ssub.s32 1, %s2
  %s5 = scalar_select 0, %s4, %s2
  // Predicated region
  $region2: #{relu_pallas.1} parent=0 // pred_check
    _
  $region3: #{relu_pallas.1} parent=0 // pred_check_branch
    %7 = sbr.rel (0) target = $region5
  $region4: #{relu_pallas.1} parent=0 // pred_region
    _
  $region5: #{relu_pallas.1} parent=0 // pred_fallthru
    _
  %v8 = vld [vmem:[%s0] sm:$0xff]
  %v9 = vld [vmem:[%s0 + $0x8] sm:$0xff]
  %v10 = vld [vmem:[%s0 + $0x10] sm:$0xff]
  %v11 = vld [vmem:[%s0 + $0x18] sm:$0xff]
  %v12 = vld [vmem:[%s0 + $0x20] sm:$0xff]
  %v13 = vld [vmem:[%s0 + $0x28] sm:$0xff]
  %v14 = vld [vmem:[%s0 + $0x30] sm:$0xff]
  %v15 = vld [vmem:[%s0 + $0x38] sm:$0xff]
  %v16 = vld [vmem:[%s0 + $0x40] sm:$0xff]
  %v17 = vld [vmem:[%s0 + $0x48] sm:$0xff]
  %v18 = vld [vmem:[%s0 + $0x50] sm:$0xff]
  %v19 = vld [vmem:[%s0 + $0x58] sm:$0xff]
  %v20 = vld [vmem:[%s0 + $0x60] sm:$0xff]
  %v21 = vld [vmem:[%s0 + $0x68] sm:$0xff]
  %v22 = vld [vmem:[%s0 + $0x70] sm:$0xff]
  %v23 = vld [vmem:[%s0 + $0x78] sm:$0xff]
  %v24 = vld [vmem:[%s0 + $0x80] sm:$0xff]
  %v25 = vld [vmem:[%s0 + $0x88] sm:$0xff]
  %v26 = vld [vmem:[%s0 + $0x90] sm:$0xff]
  %v27 = vld [vmem:[%s0 + $0x98] sm:$0xff]
  %v28 = vld [vmem:[%s0 + $0xa0] sm:$0xff]
  %v29 = vld [vmem:[%s0 + $0xa8] sm:$0xff]
  %v30 = vld [vmem:[%s0 + $0xb0] sm:$0xff]
  %v31 = vld [vmem:[%s0 + $0xb8] sm:$0xff]
  %v32 = vld [vmem:[%s0 + $0xc0] sm:$0xff]
  %v33 = vld [vmem:[%s0 + $0xc8] sm:$0xff]
  %v34 = vld [vmem:[%s0 + $0xd0] sm:$0xff]
  %v35 = vld [vmem:[%s0 + $0xd8] sm:$0xff]
  %v36 = vld [vmem:[%s0 + $0xe0] sm:$0xff]
  %v37 = vld [vmem:[%s0 + $0xe8] sm:$0xff]
  %v38 = vld [vmem:[%s0 + $0xf0] sm:$0xff]
  %v39 = vld [vmem:[%s0 + $0xf8] sm:$0xff]
  %v40 = vld [vmem:[%s0 + $0x100] sm:$0xff]
  %v41 = vld [vmem:[%s0 + $0x108] sm:$0xff]
  %v42 = vld [vmem:[%s0 + $0x110] sm:$0xff]
  %v43 = vld [vmem:[%s0 + $0x118] sm:$0xff]
  %v44 = vld [vmem:[%s0 + $0x120] sm:$0xff]
  %v45 = vld [vmem:[%s0 + $0x128] sm:$0xff]
  %v46 = vld [vmem:[%s0 + $0x130] sm:$0xff]
  %v47 = vld [vmem:[%s0 + $0x138] sm:$0xff]
  %v48 = vld [vmem:[%s0 + $0x140] sm:$0xff]
  %v49 = vld [vmem:[%s0 + $0x148] sm:$0xff]
  %v50 = vld [vmem:[%s0 + $0x150] sm:$0xff]
  %v51 = vld [vmem:[%s0 + $0x158] sm:$0xff]
  %v52 = vld [vmem:[%s0 + $0x160] sm:$0xff]
  %v53 = vld [vmem:[%s0 + $0x168] sm:$0xff]
  %v54 = vld [vmem:[%s0 + $0x170] sm:$0xff]
  %v55 = vld [vmem:[%s0 + $0x178] sm:$0xff]
  %v56 = vld [vmem:[%s0 + $0x180] sm:$0xff]
  %v57 = vld [vmem:[%s0 + $0x188] sm:$0xff]
  %v58 = vld [vmem:[%s0 + $0x190] sm:$0xff]
  %v59 = vld [vmem:[%s0 + $0x198] sm:$0xff]
  %v60 = vld [vmem:[%s0 + $0x1a0] sm:$0xff]
  %v61 = vld [vmem:[%s0 + $0x1a8] sm:$0xff]
  %v62 = vmax.f32 %v8, 0.0
  %v63 = vmax.f32 %v9, 0.0
  %v64 = vmax.f32 %v10, 0.0
  %v65 = vmax.f32 %v11, 0.0
  %v66 = vmax.f32 %v12, 0.0
  %v67 = vmax.f32 %v13, 0.0
  %v68 = vmax.f32 %v14, 0.0
  %v69 = vmax.f32 %v15, 0.0
  %v70 = vmax.f32 %v16, 0.0
  %v71 = vmax.f32 %v17, 0.0
  %v72 = vmax.f32 %v18, 0.0
  %v73 = vmax.f32 %v19, 0.0
  %v74 = vmax.f32 %v20, 0.0
  %v75 = vmax.f32 %v21, 0.0
  %v76 = vmax.f32 %v22, 0.0
  %v77 = vmax.f32 %v23, 0.0
  %v78 = vmax.f32 %v24, 0.0
  %v79 = vmax.f32 %v25, 0.0
  %v80 = vmax.f32 %v26, 0.0
  %v81 = vmax.f32 %v27, 0.0
  %v82 = vmax.f32 %v28, 0.0
  %v83 = vmax.f32 %v29, 0.0
  %v84 = vmax.f32 %v30, 0.0
  %v85 = vmax.f32 %v31, 0.0
  %v86 = vmax.f32 %v32, 0.0
  %v87 = vmax.f32 %v33, 0.0
  %v88 = vmax.f32 %v34, 0.0
  %v89 = vmax.f32 %v35, 0.0
  %v90 = vmax.f32 %v36, 0.0
  %v91 = vmax.f32 %v37, 0.0
  %v92 = vmax.f32 %v38, 0.0
  %v93 = vmax.f32 %v39, 0.0
  %v94 = vmax.f32 %v40, 0.0
  %v95 = vmax.f32 %v41, 0.0
  %v96 = vmax.f32 %v42, 0.0
  %v97 = vmax.f32 %v43, 0.0
  %v98 = vmax.f32 %v44, 0.0
  %v99 = vmax.f32 %v45, 0.0
  %v100 = vmax.f32 %v46, 0.0
  %v101 = vmax.f32 %v47, 0.0
  %v102 = vmax.f32 %v48, 0.0
  %v103 = vmax.f32 %v49, 0.0
  %v104 = vmax.f32 %v50, 0.0
  %v105 = vmax.f32 %v51, 0.0
  %v106 = vmax.f32 %v52, 0.0
  %v107 = vmax.f32 %v53, 0.0
  %v108 = vmax.f32 %v54, 0.0
  %v109 = vmax.f32 %v55, 0.0
  %v110 = vmax.f32 %v56, 0.0
  %v111 = vmax.f32 %v57, 0.0
  %v112 = vmax.f32 %v58, 0.0
  %v113 = vmax.f32 %v59, 0.0
  %v114 = vmax.f32 %v60, 0.0
  %v115 = vmax.f32 %v61, 0.0
  %116 = vst [vmem:[%s1] sm:$0xff] %v62
  %117 = vst [vmem:[%s1 + $0x8] sm:$0xff] %v63
  %118 = vst [vmem:[%s1 + $0x10] sm:$0xff] %v64
  %119 = vst [vmem:[%s1 + $0x18] sm:$0xff] %v65
  %120 = vst [vmem:[%s1 + $0x20] sm:$0xff] %v66
  %121 = vst [vmem:[%s1 + $0x28] sm:$0xff] %v67
  %122 = vst [vmem:[%s1 + $0x30] sm:$0xff] %v68
  %123 = vst [vmem:[%s1 + $0x38] sm:$0xff] %v69
  %124 = vst [vmem:[%s1 + $0x40] sm:$0xff] %v70
  %125 = vst [vmem:[%s1 + $0x48] sm:$0xff] %v71
  %126 = vst [vmem:[%s1 + $0x50] sm:$0xff] %v72
  %127 = vst [vmem:[%s1 + $0x58] sm:$0xff] %v73
  %128 = vst [vmem:[%s1 + $0x60] sm:$0xff] %v74
  %129 = vst [vmem:[%s1 + $0x68] sm:$0xff] %v75
  %130 = vst [vmem:[%s1 + $0x70] sm:$0xff] %v76
  %131 = vst [vmem:[%s1 + $0x78] sm:$0xff] %v77
  %132 = vst [vmem:[%s1 + $0x80] sm:$0xff] %v78
  %133 = vst [vmem:[%s1 + $0x88] sm:$0xff] %v79
  %134 = vst [vmem:[%s1 + $0x90] sm:$0xff] %v80
  %135 = vst [vmem:[%s1 + $0x98] sm:$0xff] %v81
  %136 = vst [vmem:[%s1 + $0xa0] sm:$0xff] %v82
  %137 = vst [vmem:[%s1 + $0xa8] sm:$0xff] %v83
  %138 = vst [vmem:[%s1 + $0xb0] sm:$0xff] %v84
  %139 = vst [vmem:[%s1 + $0xb8] sm:$0xff] %v85
  %140 = vst [vmem:[%s1 + $0xc0] sm:$0xff] %v86
  %141 = vst [vmem:[%s1 + $0xc8] sm:$0xff] %v87
  %142 = vst [vmem:[%s1 + $0xd0] sm:$0xff] %v88
  %143 = vst [vmem:[%s1 + $0xd8] sm:$0xff] %v89
  %144 = vst [vmem:[%s1 + $0xe0] sm:$0xff] %v90
  %145 = vst [vmem:[%s1 + $0xe8] sm:$0xff] %v91
  %146 = vst [vmem:[%s1 + $0xf0] sm:$0xff] %v92
  %147 = vst [vmem:[%s1 + $0xf8] sm:$0xff] %v93
  %148 = vst [vmem:[%s1 + $0x100] sm:$0xff] %v94
  %149 = vst [vmem:[%s1 + $0x108] sm:$0xff] %v95
  %150 = vst [vmem:[%s1 + $0x110] sm:$0xff] %v96
  %151 = vst [vmem:[%s1 + $0x118] sm:$0xff] %v97
  %152 = vst [vmem:[%s1 + $0x120] sm:$0xff] %v98
  %153 = vst [vmem:[%s1 + $0x128] sm:$0xff] %v99
  %154 = vst [vmem:[%s1 + $0x130] sm:$0xff] %v100
  %155 = vst [vmem:[%s1 + $0x138] sm:$0xff] %v101
  %156 = vst [vmem:[%s1 + $0x140] sm:$0xff] %v102
  %157 = vst [vmem:[%s1 + $0x148] sm:$0xff] %v103
  %158 = vst [vmem:[%s1 + $0x150] sm:$0xff] %v104
  %159 = vst [vmem:[%s1 + $0x158] sm:$0xff] %v105
  %160 = vst [vmem:[%s1 + $0x160] sm:$0xff] %v106
  %161 = vst [vmem:[%s1 + $0x168] sm:$0xff] %v107
  %162 = vst [vmem:[%s1 + $0x170] sm:$0xff] %v108
  %163 = vst [vmem:[%s1 + $0x178] sm:$0xff] %v109
  %164 = vst [vmem:[%s1 + $0x180] sm:$0xff] %v110
  %165 = vst [vmem:[%s1 + $0x188] sm:$0xff] %v111
  %166 = vst [vmem:[%s1 + $0x190] sm:$0xff] %v112
  %167 = vst [vmem:[%s1 + $0x198] sm:$0xff] %v113
  %168 = vst [vmem:[%s1 + $0x1a0] sm:$0xff] %v114
  %169 = vst [vmem:[%s1 + $0x1a8] sm:$0xff] %v115
  // Predicated region
  $region6: #{relu_pallas.1} parent=0 // pred_check
    _
  $region7: #{relu_pallas.1} parent=0 // pred_check_branch
    %171 = sbr.rel (0) target = $region9
  $region8: #{relu_pallas.1} parent=0 // pred_region
    _
  $region9: #{relu_pallas.1} parent=0 // pred_fallthru
    _
  // Predicated region
  $region10: #{relu_pallas.1} parent=0 // pred_check
    _
  $region11: #{relu_pallas.1} parent=0 // pred_check_branch
    %173 = sbr.rel (0) target = $region13
  $region12: #{relu_pallas.1} parent=0 // pred_region
    _
  $region13: #{relu_pallas.1} parent=0 // pred_fallthru
    _

</llo_original>
